<compile_context>
chip_gen: v5e
topology: v5e:2x2
jax: 0.10.0
libtpu: 0.0.40
codegen_flags: <defaults>
</compile_context>

<pallas_src>
import functools

import jax
import jax.numpy as jnp
from jax.experimental import pallas as pl
from jax.experimental.pallas import tpu as pltpu

NUM_EXPERTS = 8
HIDDEN = 128          # fixed 128-dim projection in the reference module
MAX_TILE_B = 4096     # batch-tile ceiling (see VMEM budget note above)


# ----------------------------------------------------------------------------
# Pallas kernel: fused (folded) matmul + temperature scale + softmax
# ----------------------------------------------------------------------------
def _router_kernel(temp_ref,    # SMEM (1,)           f32 : temperature
                   f_ref,       # VMEM (TILE_B, Fd)   bf16
                   t_ref,       # VMEM (TILE_B, Td)   bf16
                   wf_ref,      # VMEM (Fd, E)        bf16 folded feature weight
                   wt_ref,      # VMEM (Td, E)        bf16 folded text weight
                   probs_ref,   # VMEM (TILE_B, E)    f32
                   logits_ref): # VMEM (TILE_B, E)    f32
    # Single fused matmul stage (hidden-128 projection folded into weights).
    # bf16 operands, f32 accumulation on the MXU.
    logits = (jnp.dot(f_ref[...], wf_ref[...],
                      preferred_element_type=jnp.float32) +
              jnp.dot(t_ref[...], wt_ref[...],
                      preferred_element_type=jnp.float32))

    # logits / clamp(temperature, min=0.1): one scalar reciprocal + multiply.
    # (The PyTorch module returns the temperature-scaled logits, so this
    #  matches the reference semantics.)
    inv_temp = 1.0 / jnp.maximum(temp_ref[0], jnp.float32(0.1))
    logits = logits * inv_temp

    # Softmax over the E-wide last axis. No lane mask is needed: the folded
    # weights carry only the E real expert columns. Exact divide by the
    # (TILE_B, 1) denominator so rows sum to 1 exactly (f32 rounding only).
    m = jnp.max(logits, axis=1, keepdims=True)
    e = jnp.exp(logits - m)
    s = jnp.sum(e, axis=1, keepdims=True)
    probs = e / s

    # Two narrow (TILE_B, E) f32 stores — only the meaningful bytes hit HBM.
    probs_ref[...] = probs
    logits_ref[...] = logits


@functools.partial(jax.jit, static_argnames=("tile_b",))
def _router_pallas(temperature, feature, text, wf, wt, *, tile_b):
    b_pad, fd = feature.shape
    td = text.shape[1]
    n_exp = wf.shape[1]
    grid = (b_pad // tile_b,)
    return pl.pallas_call(
        _router_kernel,
        out_shape=(jax.ShapeDtypeStruct((b_pad, n_exp), jnp.float32),   # probs
                   jax.ShapeDtypeStruct((b_pad, n_exp), jnp.float32)),  # logits
        grid=grid,
        in_specs=[
            pl.BlockSpec(memory_space=pltpu.MemorySpace.SMEM),   # temperature
            pl.BlockSpec((tile_b, fd), lambda i: (i, 0)),        # feature tile
            pl.BlockSpec((tile_b, td), lambda i: (i, 0)),        # text tile
            pl.BlockSpec((fd, n_exp), lambda i: (0, 0)),         # W_f (resident)
            pl.BlockSpec((td, n_exp), lambda i: (0, 0)),         # W_t (resident)
        ],
        out_specs=(
            pl.BlockSpec((tile_b, n_exp), lambda i: (i, 0)),     # probs
            pl.BlockSpec((tile_b, n_exp), lambda i: (i, 0)),     # logits
        ),
        # TODO(synk): on v7x, switch to pltpu.CORE_PARALLEL (or pl.core_map
        # over a 2-TC mesh) if xprof shows one TensorCore idle; "parallel" is
        # kept here for portability across v5e/v6e/v7x.
        compiler_params=pltpu.CompilerParams(
            dimension_semantics=("parallel",)),
    )(temperature, feature, text, wf, wt)


# ----------------------------------------------------------------------------
# Parameters (synthetic, init-matching) + forward wrapper
# ----------------------------------------------------------------------------
def init_bayesian_router(key, feature_dim, text_dim, num_experts=NUM_EXPERTS):
    k_fmu, k_tmu, k_trho, k_cmu, k_crho = jax.random.split(key, 5)
    # kaiming_normal_(mode='fan_in', nonlinearity='leaky_relu')
    gain = (2.0 / (1.0 + 0.01 ** 2)) ** 0.5
    std_f = gain / (feature_dim ** 0.5)
    return {
        "feature_mu": jax.random.normal(k_fmu, (feature_dim, HIDDEN),
                                        jnp.float32) * std_f,
        "feature_rho": jnp.full((feature_dim, HIDDEN), -3.0, jnp.float32),
        "text_mu": jax.random.normal(k_tmu, (text_dim, HIDDEN),
                                     jnp.float32) * 0.1,
        "text_rho": jax.random.normal(k_trho, (text_dim, HIDDEN),
                                      jnp.float32) * 0.1 - 3.0,
        "combined_mu": jax.random.normal(k_cmu, (2 * HIDDEN, num_experts),
                                         jnp.float32) * 0.1,
        "combined_rho": jax.random.normal(k_crho, (2 * HIDDEN, num_experts),
                                          jnp.float32) * 0.1 - 3.0,
        "temperature": jnp.ones((1,), jnp.float32),
    }


def _reparameterize(mu, rho, epsilon):
    # mu + log(1 + exp(rho)) * eps  (parameter-prep glue, XLA elementwise)
    return mu + jnp.log1p(jnp.exp(rho)) * epsilon


def _round_up(x, m):
    return (x + m - 1) // m * m


def _pad_rows(x, rows):
    if x.shape[0] == rows:
        return x
    return jnp.pad(x, ((0, rows - x.shape[0]), (0, 0)))


def _choose_tile(batch, max_tile=MAX_TILE_B):
    """Pick (tile_b, b_pad): minimal tile count with <=~16 rows of padding per
    tile; even tile count when >1 so both v7x TensorCores get grid steps."""
    num_tiles = max(1, -(-batch // max_tile))
    if num_tiles > 1 and num_tiles % 2:
        num_tiles += 1
    tile_b = _round_up(-(-batch // num_tiles), 16)   # bf16: 16-row sublane tile
    return tile_b, num_tiles * tile_b


def _fold(w_proj, w_comb_half):
    """Fold the hidden-128 projection: (in_dim,128) @ (128,E) -> (in_dim,E).

    Done once per forward in f32 (tiny matmul); only the E real expert
    columns are kept — no lane duplication / zero padding."""
    return jnp.dot(w_proj, w_comb_half, preferred_element_type=jnp.float32)


def bayesian_router_forward(params, feature, text_embedding,
                            sampling=True, training=True, rng=None):
    """Mirrors BayesianRouter.forward; returns (probs, logits).

    Note: the returned logits are the temperature-scaled logits, matching the
    PyTorch module (which reassigns `logits` before returning)."""
    num_experts = params["combined_mu"].shape[1]

    if sampling and training:
        assert rng is not None
        k_f, k_t, k_c = jax.random.split(rng, 3)
        eps_f = jax.random.normal(k_f, params["feature_mu"].shape, jnp.float32)
        eps_t = jax.random.normal(k_t, params["text_mu"].shape, jnp.float32)
        eps_c = jax.random.normal(k_c, params["combined_mu"].shape, jnp.float32)
        feature_weight = _reparameterize(params["feature_mu"],
                                         params["feature_rho"], eps_f)
        text_weight = _reparameterize(params["text_mu"],
                                      params["text_rho"], eps_t)
        combined_weight = _reparameterize(params["combined_mu"],
                                          params["combined_rho"], eps_c)
    else:
        feature_weight = params["feature_mu"]
        text_weight = params["text_mu"]
        combined_weight = params["combined_mu"]

    # Fold the hidden-128 projection out of the hot path (f32 fold, then a
    # single bf16 cast). bf16 operands halve HBM read bytes and are MXU-native;
    # results will not bit-match an f32 reference.
    wf = _fold(feature_weight, combined_weight[:HIDDEN, :]).astype(jnp.bfloat16)
    wt = _fold(text_weight, combined_weight[HIDDEN:, :]).astype(jnp.bfloat16)

    feature_bf = feature.astype(jnp.bfloat16)
    text_bf = text_embedding.astype(jnp.bfloat16)

    # Batch tiling with minimal padding waste (<~16 rows per tile).
    batch = feature.shape[0]
    tile_b, b_pad = _choose_tile(batch)
    feature_bf = _pad_rows(feature_bf, b_pad)
    text_bf = _pad_rows(text_bf, b_pad)

    probs, logits = _router_pallas(params["temperature"], feature_bf, text_bf,
                                   wf, wt, tile_b=tile_b)
    probs = probs[:batch]
    logits = logits[:batch]

    if not training:
        # topk(1) + one-hot scatter: tiny (B, E) glue, left in plain JAX.
        top_idx = jnp.argmax(probs, axis=1)
        probs = jax.nn.one_hot(top_idx, num_experts, dtype=probs.dtype)
    return probs, logits


# ----------------------------------------------------------------------------
# Demo
# ----------------------------------------------------------------------------
if __name__ == "__main__":
    B, FEATURE_DIM, TEXT_DIM = 2, 32, 16

    key = jax.random.PRNGKey(0)
    k_params, k_feat, k_text, k_eps = jax.random.split(key, 4)

    params = init_bayesian_router(k_params, FEATURE_DIM, TEXT_DIM, NUM_EXPERTS)
    feature = jax.random.normal(k_feat, (B, FEATURE_DIM), jnp.float32)
    text_embedding = jax.random.normal(k_text, (B, TEXT_DIM), jnp.float32)

    # training path (sampled weights via reparameterization trick)
    probs_train, logits_train = bayesian_router_forward(
        params, feature, text_embedding, sampling=True, training=True,
        rng=k_eps)
    # eval path (mean weights, one-hot routing)
    probs_eval, logits_eval = bayesian_router_forward(
        params, feature, text_embedding, sampling=True, training=False)

    jax.block_until_ready((probs_train, logits_train, probs_eval, logits_eval))

    assert probs_train.shape == (B, NUM_EXPERTS)
    assert logits_train.shape == (B, NUM_EXPERTS)
    assert probs_eval.shape == (B, NUM_EXPERTS)
    assert logits_eval.shape == (B, NUM_EXPERTS)
    # Exact softmax normalization (f32 rounding only); eval probs are one-hot.
    assert bool(jnp.allclose(jnp.sum(probs_train, axis=1), 1.0, atol=1e-5))
    assert bool(jnp.allclose(jnp.sum(probs_eval, axis=1), 1.0, atol=1e-6))

    print("KERNEL_OK")
</pallas_src>

<mosaic_0001>
module attributes {stable_mosaic.version = 11 : i64} {
  func.func @_router_kernel(%arg0: i32, %arg1: memref<1xf32, #tpu.memory_space<smem>>, %arg2: memref<16x32xbf16, #tpu.memory_space<vmem>>, %arg3: memref<16x16xbf16, #tpu.memory_space<vmem>>, %arg4: memref<32x8xbf16, #tpu.memory_space<vmem>>, %arg5: memref<16x8xbf16, #tpu.memory_space<vmem>>, %arg6: memref<16x8xf32, #tpu.memory_space<vmem>>, %arg7: memref<16x8xf32, #tpu.memory_space<vmem>>) attributes {dimension_semantics = [#tpu.dimension_semantics<parallel>], iteration_bounds = array<i64: 1>, scalar_prefetch = 0 : i64, scratch_operands = 0 : i64, tpu.core_type = #tpu.core_type<tc>, window_params = [{transform_indices = @transform_0, window_bounds = array<i64: 1>}, {transform_indices = @transform_1, window_bounds = array<i64: 16, 32>}, {transform_indices = @transform_2, window_bounds = array<i64: 16, 16>}, {pipeline_mode = #tpu.pipeline_mode<synchronous>, transform_indices = @transform_3, window_bounds = array<i64: 32, 8>}, {pipeline_mode = #tpu.pipeline_mode<synchronous>, transform_indices = @transform_4, window_bounds = array<i64: 16, 8>}, {transform_indices = @transform_5, window_bounds = array<i64: 16, 8>}, {transform_indices = @transform_6, window_bounds = array<i64: 16, 8>}]} {
    %c0 = arith.constant 0 : index
    %c0_0 = arith.constant 0 : index
    %0 = vector.load %arg2[%c0, %c0_0] : memref<16x32xbf16, #tpu.memory_space<vmem>>, vector<16x32xbf16>
    %c0_1 = arith.constant 0 : index
    %c0_2 = arith.constant 0 : index
    %1 = vector.load %arg4[%c0_1, %c0_2] : memref<32x8xbf16, #tpu.memory_space<vmem>>, vector<32x8xbf16>
    %cst = arith.constant dense<0.000000e+00> : vector<16x8xf32>
    %2 = tpu.matmul %0, %1, %cst {dimension_numbers = #tpu.dot_dimension_numbers<[1], [0], [0], [1], [0, 0, 1, 1], [], []>} : vector<16x32xbf16>, vector<32x8xbf16>, vector<16x8xf32> -> vector<16x8xf32>
    %c0_3 = arith.constant 0 : index
    %c0_4 = arith.constant 0 : index
    %3 = vector.load %arg3[%c0_3, %c0_4] : memref<16x16xbf16, #tpu.memory_space<vmem>>, vector<16x16xbf16>
    %c0_5 = arith.constant 0 : index
    %c0_6 = arith.constant 0 : index
    %4 = vector.load %arg5[%c0_5, %c0_6] : memref<16x8xbf16, #tpu.memory_space<vmem>>, vector<16x8xbf16>
    %cst_7 = arith.constant dense<0.000000e+00> : vector<16x8xf32>
    %5 = tpu.matmul %3, %4, %cst_7 {dimension_numbers = #tpu.dot_dimension_numbers<[1], [0], [0], [1], [0, 0, 1, 1], [], []>} : vector<16x16xbf16>, vector<16x8xbf16>, vector<16x8xf32> -> vector<16x8xf32>
    %6 = arith.addf %2, %5 : vector<16x8xf32>
    %c0_8 = arith.constant 0 : index
    %7 = memref.load %arg1[%c0_8] : memref<1xf32, #tpu.memory_space<smem>>
    %cst_9 = arith.constant 1.000000e-01 : f32
    %8 = arith.maximumf %7, %cst_9 : f32
    %cst_10 = arith.constant 1.000000e+00 : f32
    %9 = arith.divf %cst_10, %8 : f32
    %10 = vector.broadcast %9 : f32 to vector<16x8xf32>
    %11 = arith.mulf %6, %10 : vector<16x8xf32>
    %cst_11 = arith.constant dense<0xFF800000> : vector<16xf32>
    %12 = vector.multi_reduction <maximumf>, %11, %cst_11 [1] : vector<16x8xf32> to vector<16xf32>
    %13 = vector.shape_cast %12 : vector<16xf32> to vector<16x1xf32>
    %14 = vector.broadcast %13 : vector<16x1xf32> to vector<16x8xf32>
    %15 = arith.subf %11, %14 : vector<16x8xf32>
    %16 = math.exp %15 : vector<16x8xf32>
    %cst_12 = arith.constant dense<0.000000e+00> : vector<16xf32>
    %17 = vector.multi_reduction <add>, %16, %cst_12 [1] : vector<16x8xf32> to vector<16xf32>
    %18 = vector.shape_cast %17 : vector<16xf32> to vector<16x1xf32>
    %19 = vector.broadcast %18 : vector<16x1xf32> to vector<16x8xf32>
    %20 = arith.divf %16, %19 : vector<16x8xf32>
    %c0_13 = arith.constant 0 : index
    %c0_14 = arith.constant 0 : index
    %21 = vector.load %arg6[%c0_13, %c0_14] : memref<16x8xf32, #tpu.memory_space<vmem>>, vector<16x8xf32>
    tpu.vector_store %arg6[%c0_13, %c0_14], %20 {strides = array<i32>} : memref<16x8xf32, #tpu.memory_space<vmem>>, vector<16x8xf32>,
    %c0_15 = arith.constant 0 : index
    %c0_16 = arith.constant 0 : index
    %22 = vector.load %arg7[%c0_15, %c0_16] : memref<16x8xf32, #tpu.memory_space<vmem>>, vector<16x8xf32>
    tpu.vector_store %arg7[%c0_15, %c0_16], %11 {strides = array<i32>} : memref<16x8xf32, #tpu.memory_space<vmem>>, vector<16x8xf32>,
    return
  }
  func.func @transform_0(%arg0: i32) -> i32 {
    %c0_i32 = arith.constant 0 : i32
    %c0_i32_0 = arith.constant 0 : i32
    return %c0_i32 : i32
  }
  func.func @transform_1(%arg0: i32) -> (i32, i32) {
    %c0_i32 = arith.constant 0 : i32
    %c0_i32_0 = arith.constant 0 : i32
    return %arg0, %c0_i32 : i32, i32
  }
  func.func @transform_2(%arg0: i32) -> (i32, i32) {
    %c0_i32 = arith.constant 0 : i32
    %c0_i32_0 = arith.constant 0 : i32
    return %arg0, %c0_i32 : i32, i32
  }
  func.func @transform_3(%arg0: i32) -> (i32, i32) {
    %c0_i32 = arith.constant 0 : i32
    %c0_i32_0 = arith.constant 0 : i32
    %c0_i32_1 = arith.constant 0 : i32
    return %c0_i32, %c0_i32_0 : i32, i32
  }
  func.func @transform_4(%arg0: i32) -> (i32, i32) {
    %c0_i32 = arith.constant 0 : i32
    %c0_i32_0 = arith.constant 0 : i32
    %c0_i32_1 = arith.constant 0 : i32
    return %c0_i32, %c0_i32_0 : i32, i32
  }
  func.func @transform_5(%arg0: i32) -> (i32, i32) {
    %c0_i32 = arith.constant 0 : i32
    %c0_i32_0 = arith.constant 0 : i32
    return %arg0, %c0_i32 : i32, i32
  }
  func.func @transform_6(%arg0: i32) -> (i32, i32) {
    %c0_i32 = arith.constant 0 : i32
    %c0_i32_0 = arith.constant 0 : i32
    return %arg0, %c0_i32 : i32, i32
  }
}

</mosaic_0001>

<llo_original>
// kernel: _router_pallas.1
$region0: #{_router_pallas.1}
  #allocation0 [shape = 'u32[]', space=smem, size = 0x4, offset = 0x4, fixed_abs, tag = 'smem constant byte address 0x4 - core index']
  #allocation1 [shape = 'u32[72,128]{1,0:T(1,128)}', space=vmem, size = 0x9000, scoped, tag = 'internal scratch']
  #allocation2 [shape = 'f32[1]{0:T(128)S(6)}', space=smem, size = 0x200, scoped, tag = 'scoped memory for _router_pallas.1']
  %s0 = inlined_call_operand.<no memory space> [shape: f32[1], index: 0, kind: input, shape index: {}]
  %s1 = inlined_call_operand.vmem [shape: bf16[16,32], index: 1, kind: input, shape index: {}]
  %s2 = inlined_call_operand.vmem [shape: bf16[16,16], index: 2, kind: input, shape index: {}]
  %s3 = inlined_call_operand.vmem [shape: bf16[32,8], index: 3, kind: input, shape index: {}]
  %s4 = inlined_call_operand.vmem [shape: bf16[16,8], index: 4, kind: input, shape index: {}]
  %s5 = inlined_call_operand.vmem [shape: f32[16,8], index: 5, kind: output, shape index: {0}]
  %s6 = inlined_call_operand.vmem [shape: f32[16,8], index: 6, kind: output, shape index: {1}]
  %7 = xla_tuple %s5, %s6
  %s8 = sld [smem:[#allocation0]]
  $region38: #{_router_pallas.1} parent=0
    _
  %s10 = ssub.s32 1, %s8
  %s11 = scalar_select 0, %s10, %s8
  %12 = sst [smem:[#allocation2]] %s0
  // Predicated region
  $region2: #{_router_pallas.1} parent=0 // pred_check
    _
  $region3: #{_router_pallas.1} parent=0 // pred_check_branch
    %14 = sbr.rel (0) target = $region5
  $region4: #{_router_pallas.1} parent=0 // pred_region
    _
  $region5: #{_router_pallas.1} parent=0 // pred_fallthru
    _
  // Predicated region
  $region6: #{_router_pallas.1} parent=0 // pred_check
    _
  $region7: #{_router_pallas.1} parent=0 // pred_check_branch
    %16 = sbr.rel (0) target = $region9
  $region8: #{_router_pallas.1} parent=0 // pred_region
    _
  $region9: #{_router_pallas.1} parent=0 // pred_fallthru
    _
  // Predicated region
  $region10: #{_router_pallas.1} parent=0 // pred_check
    _
  $region11: #{_router_pallas.1} parent=0 // pred_check_branch
    %18 = sbr.rel (0) target = $region13
  $region12: #{_router_pallas.1} parent=0 // pred_region
    _
  $region13: #{_router_pallas.1} parent=0 // pred_fallthru
    _
  // Predicated region
  $region14: #{_router_pallas.1} parent=0 // pred_check
    _
  $region15: #{_router_pallas.1} parent=0 // pred_check_branch
    %20 = sbr.rel (0) target = $region17
  $region16: #{_router_pallas.1} parent=0 // pred_region
    _
  $region17: #{_router_pallas.1} parent=0 // pred_fallthru
    _
  // Predicated region
  $region18: #{_router_pallas.1} parent=0 // pred_check
    _
  $region19: #{_router_pallas.1} parent=0 // pred_check_branch
    %22 = sbr.rel (0) target = $region21
  $region20: #{_router_pallas.1} parent=0 // pred_region
    _
  $region21: #{_router_pallas.1} parent=0 // pred_fallthru
    _
  %v24 = vld [vmem:[%s1] sm:$0xf]
  %v25 = vld [vmem:[%s1 + $0x4] sm:$0xf]
  %v26 = vld [vmem:[%s3] sm:$0xf]
  %v27 = vld [vmem:[%s3 + $0x4] sm:$0xf]
  %v28 = vld [vmem:[%s3 + $0x8] sm:$0xf]
  %v29 = vld [vmem:[%s3 + $0xc] sm:$0xf]
  %v30 = vld [vmem:[%s2] sm:$0xf]
  %v31 = vld [vmem:[%s2 + $0x4] sm:$0xf]
  %v32 = vld [vmem:[%s4] sm:$0xf]
  %v33 = vld [vmem:[%s4 + $0x4] sm:$0xf]
  %v36 = vunpack.c.l.b16 %v30
  %v37 = vunpack.c.l.b16 %v31
  %v38 = vpack.c.b16 %v37, %v36
  %v41 = vunpack.c.l.b16 %v32
  %v42 = vunpack.c.l.b16 %v33
  %v43 = vpack.c.b16 %v42, %v41
  %vm45 = vcmask 130048
  %v47 = vsel %vm45, %v38, 0
  %49 = vmatpush.bf16.msra.mxu0 0
  %50 = vmatpush.bf16.msra.mxu0 0
  %51 = vmatpush.bf16.msra.mxu0 0
  %52 = vmatpush.bf16.msra.mxu0 0
  %53 = vmatpush.bf16.msra.mxu0 0
  %54 = vmatpush.bf16.msra.mxu0 0
  %55 = vmatpush.bf16.msra.mxu0 0
  %56 = vmatpush.bf16.msra.mxu0 %v43
  %57 = vmatmul.bf16.gmra.mxu0 %v47
  %v58 = vpop.f32.mrf.mxu0
  %v59 = vadd.f32 0.0, %v58
  %v60 = vpop.f32.mrf.mxu0
  %v61 = vadd.f32 0.0, %v60
  %62 = vdwg.mxu0
  %v65 = vunpack.c.l.b16 %v24
  %v66 = vunpack.c.l.b16 %v25
  %v67 = vpack.c.b16 %v66, %v65
  %v72 = vunpack.c.l.b16 %v26
  %v73 = vunpack.c.l.b16 %v27
  %v74 = vunpack.c.l.b16 %v28
  %v75 = vunpack.c.l.b16 %v29
  %v76 = vpack.c.b16 %v73, %v72
  %v77 = vpack.c.b16 %v75, %v74
  %vm80 = vcmask 261120
  %v82 = vsel %vm80, %v67, 0
  %84 = vmatpush.bf16.msra.mxu0 0
  %85 = vmatpush.bf16.msra.mxu0 0
  %86 = vmatpush.bf16.msra.mxu0 0
  %87 = vmatpush.bf16.msra.mxu0 0
  %88 = vmatpush.bf16.msra.mxu0 0
  %89 = vmatpush.bf16.msra.mxu0 0
  %90 = vmatpush.bf16.msra.mxu0 %v77
  %91 = vmatpush.bf16.msra.mxu0 %v76
  %92 = vmatmul.bf16.gmra.mxu0 %v82
  %v93 = vpop.f32.mrf.mxu0
  %v94 = vadd.f32 %v59, %v93
  %v95 = vpop.f32.mrf.mxu0
  %v96 = vadd.f32 %v61, %v95
  %97 = vdwg.mxu0
  %s98 = sld [smem:[#allocation2]]
  %s99 = smax.f32 %s98, 0.1
  %v100 = vstv %s99
  %v101 = vrcp.pop %v100
  %v102 = vmul.f32 %v100, %v101
  %v103 = vsub.f32 1.0, %v102
  %v104 = vmul.f32 %v101, %v103
  %v105 = vadd.f32 %v101, %v104
  %vm106 = vweird.f32 %v100
  %vm107 = vweird.f32 %v101
  %vm108 = vmor %vm106, %vm107
  %v109 = vsel %vm108, %v101, %v105
  %v110 = vand.u32 2147483647, %v100
  %vm111 = vcmp.eq.f32.partialorder %v110, 8.507059e+37
  %v112 = vand.u32 %v100, 2147483648
  %v113 = vor.u32 1.1754944e-38, %v112
  %v114 = vsel %vm111, %v113, %v109
  %s115 = vtos %v114
  %v116 = vstv %s115
  %v117 = vmul.f32 %v94, %v116
  %v118 = vmul.f32 %v96, %v116
  %vm119 = vcmask 64512
  %v120 = vsel %vm119, %v117, -inf
  %121 = vmax.xlane.f32.xlu0 %v120
  %v122 = vpop.xlane.xlu0 %121
  %v123 = vsel %vm119, %v118, -inf
  %124 = vmax.xlane.f32.xlu0 %v123
  %v125 = vpop.xlane.xlu0 %124
  %v126 = vsub.f32 %v117, %v122
  %v127 = vsub.f32 %v118, %v125
  %v128 = vmul.f32 %v126, 1.442695
  %v129 = vpow.pop %v128
  %v130 = vmul.f32 %v127, 1.442695
  %v131 = vpow.pop %v130
  %v132 = vsel %vm119, %v129, 0.0
  %133 = vadd.xlane.f32.xlu0 %v132
  %v134 = vpop.xlane.xlu0 %133
  %v135 = vsel %vm119, %v131, 0.0
  %136 = vadd.xlane.f32.xlu0 %v135
  %v137 = vpop.xlane.xlu0 %136
  %v138 = vrcp.pop %v134
  %v139 = vmul.f32 %v134, %v138
  %v140 = vsub.f32 1.0, %v139
  %v141 = vmul.f32 %v138, %v140
  %v142 = vadd.f32 %v138, %v141
  %vm143 = vweird.f32 %v134
  %vm144 = vweird.f32 %v138
  %vm145 = vmor %vm143, %vm144
  %v146 = vsel %vm145, %v138, %v142
  %v147 = vand.u32 2147483647, %v134
  %vm148 = vcmp.eq.f32.partialorder %v147, 8.507059e+37
  %v149 = vand.u32 %v134, 2147483648
  %v150 = vor.u32 1.1754944e-38, %v149
  %v151 = vsel %vm148, %v150, %v146
  %v152 = vmul.f32 %v129, %v151
  %v153 = vrcp.pop %v137
  %v154 = vmul.f32 %v137, %v153
  %v155 = vsub.f32 1.0, %v154
  %v156 = vmul.f32 %v153, %v155
  %v157 = vadd.f32 %v153, %v156
  %vm158 = vweird.f32 %v137
  %vm159 = vweird.f32 %v153
  %vm160 = vmor %vm158, %vm159
  %v161 = vsel %vm160, %v153, %v157
  %v162 = vand.u32 2147483647, %v137
  %vm163 = vcmp.eq.f32.partialorder %v162, 8.507059e+37
  %v164 = vand.u32 %v137, 2147483648
  %v165 = vor.u32 1.1754944e-38, %v164
  %v166 = vsel %vm163, %v165, %v161
  %v167 = vmul.f32 %v131, %v166
  %168 = vst.msk [vmem:[%s5] sm:$0xff] %vm119, %v152
  %169 = vst.msk [vmem:[%s5 + $0x8] sm:$0xff] %vm119, %v167
  %170 = vst.msk [vmem:[%s6] sm:$0xff] %vm119, %v117
  %171 = vst.msk [vmem:[%s6 + $0x8] sm:$0xff] %vm119, %v118
  // Predicated region
  $region22: #{_router_pallas.1} parent=0 // pred_check
    _
  $region23: #{_router_pallas.1} parent=0 // pred_check_branch
    %173 = sbr.rel (0) target = $region25
  $region24: #{_router_pallas.1} parent=0 // pred_region
    _
  $region25: #{_router_pallas.1} parent=0 // pred_fallthru
    _
  // Predicated region
  $region26: #{_router_pallas.1} parent=0 // pred_check
    _
  $region27: #{_router_pallas.1} parent=0 // pred_check_branch
    %175 = sbr.rel (0) target = $region29
  $region28: #{_router_pallas.1} parent=0 // pred_region
    _
  $region29: #{_router_pallas.1} parent=0 // pred_fallthru
    _
  // Predicated region
  $region30: #{_router_pallas.1} parent=0 // pred_check
    _
  $region31: #{_router_pallas.1} parent=0 // pred_check_branch
    %177 = sbr.rel (0) target = $region33
  $region32: #{_router_pallas.1} parent=0 // pred_region
    _
  $region33: #{_router_pallas.1} parent=0 // pred_fallthru
    _
  // Predicated region
  $region34: #{_router_pallas.1} parent=0 // pred_check
    _
  $region35: #{_router_pallas.1} parent=0 // pred_check_branch
    %179 = sbr.rel (0) target = $region37
  $region36: #{_router_pallas.1} parent=0 // pred_region
    _
  $region37: #{_router_pallas.1} parent=0 // pred_fallthru
    _

</llo_original>
